<compile_context>
chip_gen: v6e
topology: v6e:2x2x1
jax: 0.10.0
libtpu: 0.0.40
codegen_flags: <defaults>
</compile_context>

<pallas_src>
import jax
import jax.numpy as jnp
from jax.experimental import pallas as pl
from jax.experimental.pallas import tpu as pltpu

EPS = 1e-5  # nn.LayerNorm default
_MIB = 1024 * 1024
_VMEM_CAP = 48 * _MIB  # conservative cap so the config also fits v7x (64 MiB physical)


def _round_up(v, m):
    return ((v + m - 1) // m) * m


def _prenorm_linear_kernel(x_ref, w_ref, b_ref, o_ref):
    """Whole-W-resident path: o = LayerNorm(x) @ W' + b' for one row tile."""
    x = x_ref[...].astype(jnp.float32)                    # (TM, D)
    mean = jnp.mean(x, axis=-1, keepdims=True)
    c = x - mean
    var = jnp.mean(c * c, axis=-1, keepdims=True)
    y = c * jax.lax.rsqrt(var + EPS)                      # gamma/beta folded into W'/b'
    out = jnp.dot(y.astype(jnp.bfloat16), w_ref[...],
                  preferred_element_type=jnp.float32)     # (TM, H)
    o_ref[...] = (out + b_ref[...]).astype(o_ref.dtype)


def _prenorm_linear_kernel_htiled(x_ref, w_ref, b_ref, o_ref, y_ref):
    """H-tiled path: LN computed once per row tile, cached in bf16 VMEM scratch."""
    @pl.when(pl.program_id(1) == 0)
    def _():
        x = x_ref[...].astype(jnp.float32)
        mean = jnp.mean(x, axis=-1, keepdims=True)
        c = x - mean
        var = jnp.mean(c * c, axis=-1, keepdims=True)
        y_ref[...] = (c * jax.lax.rsqrt(var + EPS)).astype(jnp.bfloat16)

    out = jnp.dot(y_ref[...], w_ref[...], preferred_element_type=jnp.float32)
    o_ref[...] = (out + b_ref[...]).astype(o_ref.dtype)


def prenorm_forward(x, gamma, beta, w, b, *, tm=512, tn=512,
                    out_dtype=None, force_h_tiling=False):
    """x: (B, S, D) -> (B, S, H).  Equivalent to fn(LayerNorm(x)), fn = Linear(D, H).

    gamma/beta: (D,) LayerNorm affine params.  w: (D, H), b: (H,).
    """
    B, S, D = x.shape
    Dw, H = w.shape
    assert Dw == D

    gamma_f = gamma.reshape(D).astype(jnp.float32)
    beta_f = beta.reshape(D).astype(jnp.float32)
    w_f = w.astype(jnp.float32)
    b_f = b.reshape(H).astype(jnp.float32)

    # Fold the LayerNorm affine into the Linear (exact in f32):
    #   (y*gamma + beta) @ W + b == y @ (gamma[:,None]*W) + (beta @ W + b)
    w_folded = (gamma_f[:, None] * w_f).astype(jnp.bfloat16)   # (D, H) bf16 MXU operand
    b_folded = (beta_f @ w_f + b_f).reshape(1, H)               # (1, H) f32

    out_dtype = x.dtype if out_dtype is None else jnp.dtype(out_dtype)
    rows = B * S
    x2 = x.reshape(rows, D)
    x_it = x2.dtype.itemsize
    o_it = jnp.dtype(out_dtype).itemsize

    tm = max(8, min(tm, _round_up(rows, 8)))  # row tile, multiple of 8 (f32 sublane)
    w_bytes = D * H * 2                       # bf16 weight

    use_resident_w = (not force_h_tiling) and (2 * w_bytes + 2 * H * 4 <= 28 * _MIB)

    if use_resident_w:
        # ---------- Path A: W fully resident, no H grid axis ----------
        def _need(tm_):
            return (2 * w_bytes                 # W (budget double buffer)
                    + 2 * tm_ * D * x_it        # x double buffer
                    + 2 * tm_ * H * o_it        # out double buffer
                    + 3 * tm_ * D * 4           # f32 temporaries
                    + tm_ * H * 4               # f32 accumulator
                    + 2 * H * 4)                # bias

        while tm > 8 and _need(tm) > _VMEM_CAP:
            tm = max(8, 8 * ((tm // 2) // 8))

        grid = (pl.cdiv(rows, tm),)
        vmem_limit = int(min(_VMEM_CAP, max(_need(tm) + 8 * _MIB, 32 * _MIB)))

        out2 = pl.pallas_call(
            _prenorm_linear_kernel,
            out_shape=jax.ShapeDtypeStruct((rows, H), out_dtype),
            grid_spec=pltpu.PrefetchScalarGridSpec(
                num_scalar_prefetch=0,
                grid=grid,
                in_specs=[
                    pl.BlockSpec((tm, D), lambda r: (r, 0)),  # x row tile
                    pl.BlockSpec((D, H), lambda r: (0, 0)),   # W' resident (fetched once)
                    pl.BlockSpec((1, H), lambda r: (0, 0)),   # b' resident
                ],
                out_specs=pl.BlockSpec((tm, H), lambda r: (r, 0)),
            ),
            compiler_params=pltpu.CompilerParams(
                dimension_semantics=("parallel",),
                vmem_limit_bytes=vmem_limit),
            cost_estimate=pl.CostEstimate(
                flops=2 * rows * D * H,
                transcendentals=rows,                               # one rsqrt per row
                bytes_accessed=(rows * D * x_it + w_bytes
                                + rows * H * o_it + H * 4),
            ),
        )(x2, w_folded, b_folded)
    else:
        # ---------- Path B: H tiled, normalized y cached in VMEM scratch ----------
        tn = min(tn, _round_up(H, 128))
        tn = max(128, 128 * (tn // 128))      # lane-dense W/output tiles

        def _need(tm_):
            return (2 * D * tn * 2              # W tile double buffer
                    + 2 * tm_ * D * x_it        # x double buffer
                    + 2 * tm_ * tn * o_it       # out double buffer
                    + tm_ * D * 2               # y scratch (bf16)
                    + 3 * tm_ * D * 4           # f32 temporaries
                    + tm_ * tn * 4              # f32 accumulator
                    + 2 * tn * 4)               # bias tile

        while tm > 8 and _need(tm) > _VMEM_CAP:
            tm = max(8, 8 * ((tm // 2) // 8))

        n_row_tiles = pl.cdiv(rows, tm)
        grid = (n_row_tiles, pl.cdiv(H, tn))    # rows outer (parallel), H inner (reuse y)
        vmem_limit = int(min(_VMEM_CAP, max(_need(tm) + 8 * _MIB, 32 * _MIB)))

        out2 = pl.pallas_call(
            _prenorm_linear_kernel_htiled,
            out_shape=jax.ShapeDtypeStruct((rows, H), out_dtype),
            grid_spec=pltpu.PrefetchScalarGridSpec(
                num_scalar_prefetch=0,
                grid=grid,
                in_specs=[
                    pl.BlockSpec((tm, D), lambda r, h: (r, 0)),   # x row tile (resident over h)
                    pl.BlockSpec((D, tn), lambda r, h: (0, h)),   # W' H-tile
                    pl.BlockSpec((1, tn), lambda r, h: (0, h)),   # b' H-tile
                ],
                out_specs=pl.BlockSpec((tm, tn), lambda r, h: (r, h)),
                scratch_shapes=[pltpu.VMEM((tm, D), jnp.bfloat16)],  # cached normalized y
            ),
            compiler_params=pltpu.CompilerParams(
                dimension_semantics=("parallel", "arbitrary"),
                vmem_limit_bytes=vmem_limit),
            cost_estimate=pl.CostEstimate(
                flops=2 * rows * D * H,
                transcendentals=rows,                               # LN computed once per row
                bytes_accessed=(rows * D * x_it + n_row_tiles * w_bytes
                                + rows * H * o_it + H * 4),
            ),
        )(x2, w_folded, b_folded)

    return out2.reshape(B, S, H)


def prenorm_reference(x, gamma, beta, w, b):
    """Pure-JAX f32 reference (matches nn.LayerNorm + nn.Linear)."""
    xf = x.astype(jnp.float32)
    mean = jnp.mean(xf, axis=-1, keepdims=True)
    var = jnp.mean((xf - mean) ** 2, axis=-1, keepdims=True)
    y = (xf - mean) * jax.lax.rsqrt(var + EPS) * gamma.reshape(-1) + beta.reshape(-1)
    return (y @ w.astype(jnp.float32) + b.reshape(1, -1)).astype(x.dtype)


if __name__ == "__main__":
    # Small but lane-aligned ViT-like shapes.
    B, S, D, H = 2, 8, 128, 256

    key = jax.random.PRNGKey(0)
    kx, kg, kbe, kw, kb = jax.random.split(key, 5)

    x = jax.random.normal(kx, (B, S, D), dtype=jnp.float32)

    # LayerNorm params (non-trivial to exercise the gamma/beta fold).
    gamma = 1.0 + 0.1 * jax.random.normal(kg, (D,), dtype=jnp.float32)
    beta = 0.1 * jax.random.normal(kbe, (D,), dtype=jnp.float32)

    # fn = Linear(D, H) params, deterministic.
    w = jax.random.normal(kw, (D, H), dtype=jnp.float32) * (1.0 / jnp.sqrt(D))
    b = 0.01 * jax.random.normal(kb, (H,), dtype=jnp.float32)

    ref = prenorm_reference(x, gamma, beta, w, b)

    # Path A: whole W resident (production default for this size).
    out = prenorm_forward(x, gamma, beta, w, b)
    out = jax.block_until_ready(out)
    assert out.shape == (B, S, H), out.shape
    err_a = float(jnp.max(jnp.abs(out.astype(jnp.float32) - ref.astype(jnp.float32))))
    # bf16 MXU operands (f32 accumulation) => tolerance loosened vs pure-f32 ref.
    assert err_a < 5e-2, err_a

    # Path B: H-tiled fallback with cached normalized y (exercised on a 1x2 grid).
    out_b = prenorm_forward(x, gamma, beta, w, b, tn=128, force_h_tiling=True)
    out_b = jax.block_until_ready(out_b)
    err_b = float(jnp.max(jnp.abs(out_b.astype(jnp.float32) - ref.astype(jnp.float32))))
    assert err_b < 5e-2, err_b

    print("KERNEL_OK")
</pallas_src>

<mosaic_0001>
module attributes {stable_mosaic.version = 11 : i64} {
  func.func @_prenorm_linear_kernel(%arg0: i32, %arg1: memref<16x128xf32, #tpu.memory_space<vmem>>, %arg2: memref<128x256xbf16, #tpu.memory_space<vmem>>, %arg3: memref<1x256xf32, #tpu.memory_space<vmem>>, %arg4: memref<16x256xf32, #tpu.memory_space<vmem>>) attributes {dimension_semantics = [#tpu.dimension_semantics<parallel>], iteration_bounds = array<i64: 1>, scalar_prefetch = 0 : i64, scratch_operands = 0 : i64, tpu.core_type = #tpu.core_type<tc>, window_params = [{transform_indices = @transform_0, window_bounds = array<i64: 16, 128>}, {pipeline_mode = #tpu.pipeline_mode<synchronous>, transform_indices = @transform_1, window_bounds = array<i64: 128, 256>}, {pipeline_mode = #tpu.pipeline_mode<synchronous>, transform_indices = @transform_2, window_bounds = array<i64: 1, 256>}, {transform_indices = @transform_3, window_bounds = array<i64: 16, 256>}]} {
    %c0 = arith.constant 0 : index
    %c0_0 = arith.constant 0 : index
    %0 = vector.load %arg1[%c0, %c0_0] : memref<16x128xf32, #tpu.memory_space<vmem>>, vector<16x128xf32>
    %cst = arith.constant dense<0.000000e+00> : vector<16xf32>
    %1 = vector.multi_reduction <add>, %0, %cst [1] : vector<16x128xf32> to vector<16xf32>
    %2 = vector.shape_cast %1 : vector<16xf32> to vector<16x1xf32>
    %cst_1 = arith.constant 1.280000e+02 : f32
    %3 = vector.broadcast %cst_1 : f32 to vector<16x1xf32>
    %4 = arith.divf %2, %3 : vector<16x1xf32>
    %5 = vector.broadcast %4 : vector<16x1xf32> to vector<16x128xf32>
    %6 = arith.subf %0, %5 : vector<16x128xf32>
    %7 = arith.mulf %6, %6 : vector<16x128xf32>
    %cst_2 = arith.constant dense<0.000000e+00> : vector<16xf32>
    %8 = vector.multi_reduction <add>, %7, %cst_2 [1] : vector<16x128xf32> to vector<16xf32>
    %9 = vector.shape_cast %8 : vector<16xf32> to vector<16x1xf32>
    %cst_3 = arith.constant 1.280000e+02 : f32
    %10 = vector.broadcast %cst_3 : f32 to vector<16x1xf32>
    %11 = arith.divf %9, %10 : vector<16x1xf32>
    %cst_4 = arith.constant 9.99999974E-6 : f32
    %12 = vector.broadcast %cst_4 : f32 to vector<16x1xf32>
    %13 = arith.addf %11, %12 : vector<16x1xf32>
    %14 = math.rsqrt %13 : vector<16x1xf32>
    %15 = vector.broadcast %14 : vector<16x1xf32> to vector<16x128xf32>
    %16 = arith.mulf %6, %15 : vector<16x128xf32>
    %17 = arith.truncf %16 : vector<16x128xf32> to vector<16x128xbf16>
    %c0_5 = arith.constant 0 : index
    %c0_6 = arith.constant 0 : index
    %18 = vector.load %arg2[%c0_5, %c0_6] : memref<128x256xbf16, #tpu.memory_space<vmem>>, vector<128x256xbf16>
    %cst_7 = arith.constant dense<0.000000e+00> : vector<16x256xf32>
    %19 = tpu.matmul %17, %18, %cst_7 {dimension_numbers = #tpu.dot_dimension_numbers<[1], [0], [0], [1], [0, 0, 1, 1], [], []>} : vector<16x128xbf16>, vector<128x256xbf16>, vector<16x256xf32> -> vector<16x256xf32>
    %c0_8 = arith.constant 0 : index
    %c0_9 = arith.constant 0 : index
    %20 = vector.load %arg3[%c0_8, %c0_9] : memref<1x256xf32, #tpu.memory_space<vmem>>, vector<1x256xf32>
    %21 = vector.broadcast %20 : vector<1x256xf32> to vector<16x256xf32>
    %22 = arith.addf %19, %21 : vector<16x256xf32>
    %c0_10 = arith.constant 0 : index
    %c0_11 = arith.constant 0 : index
    %23 = vector.load %arg4[%c0_10, %c0_11] : memref<16x256xf32, #tpu.memory_space<vmem>>, vector<16x256xf32>
    tpu.vector_store %arg4[%c0_10, %c0_11], %22 {strides = array<i32>} : memref<16x256xf32, #tpu.memory_space<vmem>>, vector<16x256xf32>,
    return
  }
  func.func @transform_0(%arg0: i32) -> (i32, i32) {
    %c0_i32 = arith.constant 0 : i32
    %c0_i32_0 = arith.constant 0 : i32
    return %arg0, %c0_i32 : i32, i32
  }
  func.func @transform_1(%arg0: i32) -> (i32, i32) {
    %c0_i32 = arith.constant 0 : i32
    %c0_i32_0 = arith.constant 0 : i32
    %c0_i32_1 = arith.constant 0 : i32
    return %c0_i32, %c0_i32_0 : i32, i32
  }
  func.func @transform_2(%arg0: i32) -> (i32, i32) {
    %c0_i32 = arith.constant 0 : i32
    %c0_i32_0 = arith.constant 0 : i32
    %c0_i32_1 = arith.constant 0 : i32
    return %c0_i32, %c0_i32_0 : i32, i32
  }
  func.func @transform_3(%arg0: i32) -> (i32, i32) {
    %c0_i32 = arith.constant 0 : i32
    %c0_i32_0 = arith.constant 0 : i32
    return %arg0, %c0_i32 : i32, i32
  }
}

</mosaic_0001>

<llo_original>
// kernel: tpu_custom_call.1
$region0: #{tpu_custom_call.1}
  #allocation0 [shape = 'u32[]', space=smem, size = 0x4, offset = 0x4, fixed_abs, tag = 'smem constant byte address 0x4 - core index']
  #allocation1 [shape = 'u32[144,128]{1,0:T(1,128)}', space=vmem, size = 0x12000, scoped, tag = 'internal scratch']
  %s0 = inlined_call_operand.hbm [shape: f32[16,128], index: 0, kind: input, shape index: {}]
  %s1 = inlined_call_operand.hbm [shape: bf16[128,256], index: 1, kind: input, shape index: {}]
  %s2 = inlined_call_operand.vmem [shape: f32[1,256], index: 2, kind: input, shape index: {}]
  %s3 = inlined_call_operand.hbm [shape: f32[16,256], index: 3, kind: output, shape index: {}]
  %s4 = sld [smem:[#allocation0]]
  $region30: #{tpu_custom_call.1} parent=0
    _
  %s6 = ssub.s32 1, %s4
  %s7 = scalar_select 0, %s6, %s4
  $region1: #{tpu_custom_call.1} parent=0
    #allocation2 [shape = 'u8[8192]{0}', space=vmem, size = 0x2000, scoped, tag = 'input window, operand 0, single buffered']
    #allocation3 [shape = 's32[1]{0}', space=sflag, size = 0x4, scoped, tag = 'scoped memory for tpu_custom_call.1']
    #allocation4 [shape = 's32[1]{0}', space=sflag, size = 0x4, scoped, tag = 'scoped memory for tpu_custom_call.1']
    #allocation5 [shape = 'u8[65536]{0}', space=vmem, size = 0x10000, scoped, tag = 'input window, operand 1, single buffered']
    #allocation6 [shape = 's32[1]{0}', space=sflag, size = 0x4, scoped, tag = 'scoped memory for tpu_custom_call.1']
    #allocation7 [shape = 'u8[16384]{0}', space=vmem, size = 0x4000, scoped, tag = 'output window, operand 0, single buffered']
    %8 = vsyncpa [#allocation3], 0
    %9 = vsyncpa [#allocation6], 0
    %10 = vsyncpa [#allocation4], 0
    // Predicated region
    $region2: #{tpu_custom_call.1} parent=1 // pred_check
      _
    $region3: #{tpu_custom_call.1} parent=1 // pred_check_branch
      %12 = sbr.rel (0) target = $region5
    $region4: #{tpu_custom_call.1} parent=1 // pred_region
      %s14 = ssub.s32 256, 256
      %15 = vsyncadd [#allocation3], %s14
      %s16 = sshll.u32 [#allocation2], 4
      %s17 = int_to_ptr.vmem [resolvable:$true] %s16
      %22 = dma.hbm_to_vmem [thread:$0]  %s0, 256, %s17, [#allocation3], 128, 128, 8
    $region5: #{tpu_custom_call.1} parent=1 // pred_fallthru
      _
    // Predicated region
    $region6: #{tpu_custom_call.1} parent=1 // pred_check
      _
    $region7: #{tpu_custom_call.1} parent=1 // pred_check_branch
      %24 = sbr.rel (0) target = $region9
    $region8: #{tpu_custom_call.1} parent=1 // pred_region
      %s26 = ssub.s32 2048, 2048
      %27 = vsyncadd [#allocation6], %s26
      %s28 = sshll.u32 [#allocation5], 4
      %s29 = int_to_ptr.vmem [resolvable:$true] %s28
      %34 = dma.hbm_to_vmem [thread:$0]  %s1, 2048, %s29, [#allocation6], 128, 128, 8
    $region9: #{tpu_custom_call.1} parent=1 // pred_fallthru
      _
    // Predicated region
    $region10: #{tpu_custom_call.1} parent=1 // pred_check
      _
    $region11: #{tpu_custom_call.1} parent=1 // pred_check_branch
      %36 = sbr.rel (0) target = $region13
    $region12: #{tpu_custom_call.1} parent=1 // pred_region
      _
    $region13: #{tpu_custom_call.1} parent=1 // pred_fallthru
      _
    // Predicated region
    $region14: #{tpu_custom_call.1} parent=1 // pred_check
      _
    $region15: #{tpu_custom_call.1} parent=1 // pred_check_branch
      %38 = sbr.rel (0) target = $region17
    $region16: #{tpu_custom_call.1} parent=1 // pred_region
      %39 = dma.done [#allocation3], 256
    $region17: #{tpu_custom_call.1} parent=1 // pred_fallthru
      _
    // Predicated region
    $region18: #{tpu_custom_call.1} parent=1 // pred_check
      _
    $region19: #{tpu_custom_call.1} parent=1 // pred_check_branch
      %41 = sbr.rel (0) target = $region21
    $region20: #{tpu_custom_call.1} parent=1 // pred_region
      %42 = dma.done [#allocation6], 2048
    $region21: #{tpu_custom_call.1} parent=1 // pred_fallthru
      _
    %v44 = vld [vmem:[#allocation2] sm:$0xff]
    %v45 = vld [vmem:[#allocation2 + $0x8] sm:$0xff]
    %46 = vadd.xlane.f32.xlu0 %v44
    %v47 = vpop.xlane.xlu0 %46
    %48 = vadd.xlane.f32.xlu0 %v45
    %v49 = vpop.xlane.xlu0 %48
    %v50 = vrcp.pop 128.0
    %v51 = vmul.f32 %v47, %v50
    %v52 = vmul.f32 %v49, %v50
    %v53 = vsub.f32 %v44, %v51
    %v54 = vsub.f32 %v45, %v52
    %v55 = vmul.f32 %v53, %v53
    %v56 = vmul.f32 %v54, %v54
    %57 = vadd.xlane.f32.xlu0 %v55
    %v58 = vpop.xlane.xlu0 %57
    %59 = vadd.xlane.f32.xlu0 %v56
    %v60 = vpop.xlane.xlu0 %59
    %v61 = vmul.f32 %v58, %v50
    %v62 = vmul.f32 %v60, %v50
    %v63 = vadd.f32 %v61, 1e-05
    %v64 = vadd.f32 %v62, 1e-05
    %v65 = vrsqrt.pop %v63
    %v66 = vrsqrt.pop %v64
    %v67 = vmul.f32 %v53, %v65
    %v68 = vmul.f32 %v54, %v66
    %v69 = vpack.c.bf16 %v68, %v67
    %v70 = vld [vmem:[#allocation5] sm:$0xff]
    %v71 = vld [vmem:[#allocation5 + $0x8] sm:$0xff]
    %v72 = vld [vmem:[#allocation5 + $0x10] sm:$0xff]
    %v73 = vld [vmem:[#allocation5 + $0x18] sm:$0xff]
    %v74 = vld [vmem:[#allocation5 + $0x20] sm:$0xff]
    %v75 = vld [vmem:[#allocation5 + $0x28] sm:$0xff]
    %v76 = vld [vmem:[#allocation5 + $0x30] sm:$0xff]
    %v77 = vld [vmem:[#allocation5 + $0x38] sm:$0xff]
    %v78 = vld [vmem:[#allocation5 + $0x40] sm:$0xff]
    %v79 = vld [vmem:[#allocation5 + $0x48] sm:$0xff]
    %v80 = vld [vmem:[#allocation5 + $0x50] sm:$0xff]
    %v81 = vld [vmem:[#allocation5 + $0x58] sm:$0xff]
    %v82 = vld [vmem:[#allocation5 + $0x60] sm:$0xff]
    %v83 = vld [vmem:[#allocation5 + $0x68] sm:$0xff]
    %v84 = vld [vmem:[#allocation5 + $0x70] sm:$0xff]
    %v85 = vld [vmem:[#allocation5 + $0x78] sm:$0xff]
    %v86 = vld [vmem:[%s2] sm:$0x3]
    %v88 = vlaneseq
    %v89 = vshrl.u32 %v88, 7
    %v90 = vsub.s32 0, %v89
    %v91 = vrot.slane %v86, %v90
    %v92 = vlaneseq
    %v93 = vshrl.u32 %v92, 7
    %v94 = vsub.s32 1, %v93
    %v95 = vrot.slane %v86, %v94
    %v114 = vunpack.c.l.b16 %v70
    %v115 = vunpack.c.h.b16 %v70
    %v116 = vunpack.c.l.b16 %v71
    %v117 = vunpack.c.h.b16 %v71
    %v118 = vunpack.c.l.b16 %v72
    %v119 = vunpack.c.h.b16 %v72
    %v120 = vunpack.c.l.b16 %v73
    %v121 = vunpack.c.h.b16 %v73
    %v122 = vunpack.c.l.b16 %v74
    %v123 = vunpack.c.h.b16 %v74
    %v124 = vunpack.c.l.b16 %v75
    %v125 = vunpack.c.h.b16 %v75
    %v126 = vunpack.c.l.b16 %v76
    %v127 = vunpack.c.h.b16 %v76
    %v128 = vunpack.c.l.b16 %v77
    %v129 = vunpack.c.h.b16 %v77
    %v130 = vunpack.c.l.b16 %v78
    %v131 = vunpack.c.h.b16 %v78
    %v132 = vunpack.c.l.b16 %v79
    %v133 = vunpack.c.h.b16 %v79
    %v134 = vunpack.c.l.b16 %v80
    %v135 = vunpack.c.h.b16 %v80
    %v136 = vunpack.c.l.b16 %v81
    %v137 = vunpack.c.h.b16 %v81
    %v138 = vunpack.c.l.b16 %v82
    %v139 = vunpack.c.h.b16 %v82
    %v140 = vunpack.c.l.b16 %v83
    %v141 = vunpack.c.h.b16 %v83
    %v142 = vunpack.c.l.b16 %v84
    %v143 = vunpack.c.h.b16 %v84
    %v144 = vunpack.c.l.b16 %v85
    %v145 = vunpack.c.h.b16 %v85
    %v146 = vpack.c.b16 %v116, %v114
    %v147 = vpack.c.b16 %v117, %v115
    %v148 = vpack.c.b16 %v120, %v118
    %v149 = vpack.c.b16 %v121, %v119
    %v150 = vpack.c.b16 %v124, %v122
    %v151 = vpack.c.b16 %v125, %v123
    %v152 = vpack.c.b16 %v128, %v126
    %v153 = vpack.c.b16 %v129, %v127
    %v154 = vpack.c.b16 %v132, %v130
    %v155 = vpack.c.b16 %v133, %v131
    %v156 = vpack.c.b16 %v136, %v134
    %v157 = vpack.c.b16 %v137, %v135
    %v158 = vpack.c.b16 %v140, %v138
    %v159 = vpack.c.b16 %v141, %v139
    %v160 = vpack.c.b16 %v144, %v142
    %v161 = vpack.c.b16 %v145, %v143
    %178 = vmatprep.subr.bf16.mxu0 %v161
    %179 = vmatpush1.bf16.msra.mxu0 %v160
    %180 = vmatprep.subr.bf16.mxu0 %v159
    %181 = vmatpush1.bf16.msra.mxu0 %v158
    %182 = vmatprep.subr.bf16.mxu0 %v157
    %183 = vmatpush1.bf16.msra.mxu0 %v156
    %184 = vmatprep.subr.bf16.mxu0 %v155
    %185 = vmatpush1.bf16.msra.mxu0 %v154
    %186 = vmatprep.subr.bf16.mxu0 %v153
    %187 = vmatpush1.bf16.msra.mxu0 %v152
    %188 = vmatprep.subr.bf16.mxu0 %v151
    %189 = vmatpush1.bf16.msra.mxu0 %v150
    %190 = vmatprep.subr.bf16.mxu0 %v149
    %191 = vmatpush1.bf16.msra.mxu0 %v148
    %192 = vmatprep.subr.bf16.mxu0 %v147
    %193 = vmatpush1.bf16.msra.mxu0 %v146
    %194 = vmatprep.subr.bf16.mxu0 0
    %195 = vmatpush2.bf16.msra.mxu0 0
    %196 = vmatprep.subr.bf16.mxu0 0
    %197 = vmatpush2.bf16.msra.mxu0 0
    %198 = vmatprep.subr.bf16.mxu0 0
    %199 = vmatpush2.bf16.msra.mxu0 0
    %200 = vmatprep.subr.bf16.mxu0 0
    %201 = vmatpush2.bf16.msra.mxu0 0
    %202 = vmatprep.subr.bf16.mxu0 0
    %203 = vmatpush2.bf16.msra.mxu0 0
    %204 = vmatprep.subr.bf16.mxu0 0
    %205 = vmatpush2.bf16.msra.mxu0 0
    %206 = vmatprep.subr.bf16.mxu0 0
    %207 = vmatpush2.bf16.msra.mxu0 0
    %208 = vmatprep.subr.bf16.mxu0 0
    %209 = vmatpush2.bf16.msra.mxu0 0
    %210 = vmatprep.mubr.bf16.mxu0 0
    %211 = vmatmul.mubr.bf16.gmra.mxu0 %v69
    %v212 = vpop.f32.mrf.mxu0
    %v213 = vadd.f32 %v91, %v212
    %v214 = vpop.f32.mrf.mxu0
    %v215 = vadd.f32 %v95, %v214
    %v216 = vpop.f32.mrf.mxu0
    %v217 = vadd.f32 %v91, %v216
    %v218 = vpop.f32.mrf.mxu0
    %v219 = vadd.f32 %v95, %v218
    %220 = vdwg.mxu0
    %221 = vst [vmem:[#allocation7] sm:$0xff] %v213
    %222 = vst [vmem:[#allocation7 + $0x8] sm:$0xff] %v215
    %223 = vst [vmem:[#allocation7 + $0x10] sm:$0xff] %v217
    %224 = vst [vmem:[#allocation7 + $0x18] sm:$0xff] %v219
    // Predicated region
    $region22: #{tpu_custom_call.1} parent=1 // pred_check
      _
    $region23: #{tpu_custom_call.1} parent=1 // pred_check_branch
      %226 = sbr.rel (0) target = $region25
    $region24: #{tpu_custom_call.1} parent=1 // pred_region
      %s228 = ssub.s32 512, 512
      %229 = vsyncadd [#allocation4], %s228
      %s230 = sshll.u32 [#allocation7], 4
      %s231 = int_to_ptr.vmem [resolvable:$true] %s230
      %236 = dma.vmem_to_hbm [thread:$0]  %s231, 512, %s3, [#allocation4], 256, 256, 16
    $region25: #{tpu_custom_call.1} parent=1 // pred_fallthru
      _
    // Predicated region
    $region26: #{tpu_custom_call.1} parent=1 // pred_check
      _
    $region27: #{tpu_custom_call.1} parent=1 // pred_check_branch
      %238 = sbr.rel (0) target = $region29
    $region28: #{tpu_custom_call.1} parent=1 // pred_region
      %239 = dma.done [#allocation4], 512
    $region29: #{tpu_custom_call.1} parent=1 // pred_fallthru
      _
    %240 = vsyncpa [#allocation3], 1
    %241 = vsyncpa [#allocation6], 1
    %242 = vsyncpa [#allocation4], 1

</llo_original>
